<compile_context>
chip_gen: v7x
topology: tpu7x:2x2x1
jax: 0.10.0
libtpu: 0.0.40
codegen_flags: <defaults>
</compile_context>

<pallas_src>
import jax
import jax.numpy as jnp
from jax.experimental import pallas as pl
from jax.experimental.pallas import tpu as pltpu


def _round_up(x: int, m: int) -> int:
    return ((x + m - 1) // m) * m


def _sublane_multiple(dtype) -> int:
    # Rows per vreg sublane-pack: f32 -> 8, bf16 -> 16, int8/fp8 -> 32.
    return {4: 8, 2: 16, 1: 32}.get(jnp.dtype(dtype).itemsize, 8)


def _linear_kernel(x_ref, w_ref, b_ref, o_ref):
    # x_ref: (TM, dim_in), w_ref: (dim_in, dim_out_pad), b_ref: (1, dim_out_pad) f32
    acc = jnp.dot(x_ref[...], w_ref[...], preferred_element_type=jnp.float32)
    o_ref[...] = (acc + b_ref[...]).astype(o_ref.dtype)


def prepare_params(weight, bias, compute_dtype=None):
    """Hoisted out of the per-call path: transpose to (dim_in, dim_out) and pad
    dim_out to a multiple of 128 so output stores are lane-dense. Optionally
    narrow the resident weight to `compute_dtype` (e.g. bf16 on v5e); bias is
    kept f32 so it is added to the f32 accumulator."""
    dim_out, dim_in = weight.shape
    dim_out_pad = _round_up(dim_out, 128)
    w_dtype = compute_dtype if compute_dtype is not None else weight.dtype
    w_t = jnp.zeros((dim_in, dim_out_pad), w_dtype).at[:, :dim_out].set(
        weight.T.astype(w_dtype))
    b2d = jnp.zeros((1, dim_out_pad), jnp.float32).at[0, :dim_out].set(
        bias.astype(jnp.float32))
    return w_t, b2d, dim_out


def ignore_linear_apply(context, x, w_t, b2d, dim_out, *,
                        compute_dtype=None, force_pallas=False):
    """Pallas equivalent of IgnoreLinear.forward(context, x) with pre-prepared params.

    context : ignored (any shape)
    x       : (B, N, dim_in)
    w_t     : (dim_in, dim_out_pad)  -- pre-transposed, lane-padded weight
    b2d     : (1, dim_out_pad) f32   -- lane-padded bias
    returns : (B, N, dim_out), dtype of x
    """
    del context  # IgnoreLinear ignores the conditioning context entirely.
    B, N, dim_in = x.shape
    dim_out_pad = w_t.shape[1]
    M = B * N
    out_dtype = x.dtype

    # Small-problem bypass: the kernel only pays off for the wide hidden layers;
    # for tiny M / dim_in (e.g. the 3-wide CNF input layer) XLA fusion wins.
    if not force_pallas and (M < 256 or dim_in < 64):
        out = jnp.einsum("bnd,de->bne", x, w_t[:, :dim_out],
                         preferred_element_type=jnp.float32)
        return (out + b2d[0, :dim_out]).astype(out_dtype)

    x2d = x.reshape(M, dim_in)
    if compute_dtype is not None:
        x2d = x2d.astype(compute_dtype)
    in_dtype = x2d.dtype
    sub = _sublane_multiple(in_dtype)

    # Row tile: >= 2 grid steps when possible (megacore on v7x), <= 1024 rows,
    # aligned to the dtype's sublane packing. Ragged last block is handled by
    # Pallas (masked store), no host-side pad/slice needed.
    TM = min(1024, max(sub, _round_up(pl.cdiv(M, 2), sub)))
    grid = (pl.cdiv(M, TM),)

    itemsize_in = jnp.dtype(in_dtype).itemsize
    itemsize_out = jnp.dtype(out_dtype).itemsize
    w_bytes = w_t.size * jnp.dtype(w_t.dtype).itemsize
    b_bytes = b2d.size * 4
    # 2x buffered streamed tiles + single-buffered resident weight/bias + slack.
    tile_bytes = 2 * TM * dim_in * itemsize_in + 2 * TM * dim_out_pad * itemsize_out
    vmem_limit = min(64 << 20, max(16 << 20, w_bytes + b_bytes + tile_bytes + (2 << 20)))
    # TODO(synk): if the resident weight alone exceeds ~16 MiB (very wide layers
    # on v7x's 64 MiB VMEM), switch to a K/N-tiled path instead of full residency.

    cost = pl.CostEstimate(
        flops=2 * M * dim_in * dim_out_pad,
        bytes_accessed=(itemsize_in * (M * dim_in) + w_bytes + b_bytes
                        + itemsize_out * M * dim_out_pad),
        transcendentals=0,
    )

    def _run(single_buffer_resident):
        resident_kw = (dict(pipeline_mode=pl.Buffered(1))
                       if single_buffer_resident else {})
        return pl.pallas_call(
            _linear_kernel,
            out_shape=jax.ShapeDtypeStruct((M, dim_out_pad), out_dtype),
            grid=grid,
            in_specs=[
                pl.BlockSpec((TM, dim_in), lambda i: (i, 0)),               # x: streamed
                pl.BlockSpec((dim_in, dim_out_pad), lambda i: (0, 0),
                             **resident_kw),                                 # weight: resident
                pl.BlockSpec((1, dim_out_pad), lambda i: (0, 0),
                             **resident_kw),                                 # bias: resident
            ],
            out_specs=pl.BlockSpec((TM, dim_out_pad), lambda i: (i, 0)),
            compiler_params=pltpu.CompilerParams(
                dimension_semantics=("parallel",),
                vmem_limit_bytes=vmem_limit,
            ),
            cost_estimate=cost,
        )(x2d, w_t, b2d)

    try:
        out2d = _run(True)
    except Exception:
        # Fallback for jax versions where pipeline_mode / Buffered(1) is unsupported.
        out2d = _run(False)

    if dim_out_pad != dim_out:
        out2d = out2d[:, :dim_out]
    return out2d.reshape(B, N, dim_out)


def ignore_linear(context, x, weight, bias, *, compute_dtype=None):
    """Convenience wrapper taking PyTorch nn.Linear convention:
    weight (dim_out, dim_in), bias (dim_out,)."""
    w_t, b2d, dim_out = prepare_params(weight, bias, compute_dtype)
    return ignore_linear_apply(context, x, w_t, b2d, dim_out,
                               compute_dtype=compute_dtype)


if __name__ == "__main__":
    key = jax.random.PRNGKey(0)
    kx, kc, kw, kb, kx2, kw2, kb2 = jax.random.split(key, 7)

    # ---- Case 1: hidden-layer-like shapes; exercises the Pallas kernel, including
    # a ragged last row-block (M = 260 rows, TM = 136 -> 2 grid steps, masked tail).
    B, N = 2, 130
    dim_in, dim_out, dim_c = 64, 64, 16

    x = jax.random.normal(kx, (B, N, dim_in), dtype=jnp.float32)
    context = jax.random.normal(kc, (B, N, dim_c), dtype=jnp.float32)  # ignored

    bound = 1.0 / (dim_in ** 0.5)
    weight = jax.random.uniform(kw, (dim_out, dim_in), minval=-bound, maxval=bound,
                                dtype=jnp.float32)
    bias = jax.random.uniform(kb, (dim_out,), minval=-bound, maxval=bound,
                              dtype=jnp.float32)

    w_t, b2d, dout = prepare_params(weight, bias)
    out = ignore_linear_apply(context, x, w_t, b2d, dout, force_pallas=True)
    out = jax.block_until_ready(out)

    ref = jnp.einsum("bnd,od->bno", x, weight,
                     precision=jax.lax.Precision.HIGHEST) + bias
    assert out.shape == (B, N, dim_out)
    assert jnp.allclose(out, ref, atol=1e-4, rtol=1e-4), "Pallas path mismatch"

    # ---- Case 2: tiny first-layer shapes; goes through the einsum bypass.
    dim_in2, dim_out2 = 3, 32
    x2 = jax.random.normal(kx2, (2, 8, dim_in2), dtype=jnp.float32)
    weight2 = jax.random.uniform(kw2, (dim_out2, dim_in2), minval=-0.5, maxval=0.5,
                                 dtype=jnp.float32)
    bias2 = jax.random.uniform(kb2, (dim_out2,), minval=-0.5, maxval=0.5,
                               dtype=jnp.float32)
    out2 = jax.block_until_ready(ignore_linear(context, x2, weight2, bias2))
    ref2 = jnp.einsum("bnd,od->bno", x2, weight2,
                      precision=jax.lax.Precision.HIGHEST) + bias2
    assert out2.shape == (2, 8, dim_out2)
    assert jnp.allclose(out2, ref2, atol=1e-4, rtol=1e-4), "bypass path mismatch"

    print("KERNEL_OK")
</pallas_src>

<mosaic_0001>
module attributes {stable_mosaic.version = 11 : i64} {
  func.func @_linear_kernel(%arg0: i32, %arg1: memref<136x64xf32, #tpu.memory_space<vmem>>, %arg2: memref<64x128xf32, #tpu.memory_space<vmem>>, %arg3: memref<1x128xf32, #tpu.memory_space<vmem>>, %arg4: memref<136x128xf32, #tpu.memory_space<vmem>>) attributes {dimension_semantics = [#tpu.dimension_semantics<parallel>], iteration_bounds = array<i64: 2>, scalar_prefetch = 0 : i64, scratch_operands = 0 : i64, tpu.core_type = #tpu.core_type<tc>, window_params = [{transform_indices = @transform_0, window_bounds = array<i64: 136, 64>}, {pipeline_mode = #tpu.pipeline_mode<synchronous>, transform_indices = @transform_1, window_bounds = array<i64: 64, 128>}, {pipeline_mode = #tpu.pipeline_mode<synchronous>, transform_indices = @transform_2, window_bounds = array<i64: 1, 128>}, {transform_indices = @transform_3, window_bounds = array<i64: 136, 128>}]} {
    %c0 = arith.constant 0 : index
    %c0_0 = arith.constant 0 : index
    %0 = vector.load %arg1[%c0, %c0_0] : memref<136x64xf32, #tpu.memory_space<vmem>>, vector<136x64xf32>
    %c0_1 = arith.constant 0 : index
    %c0_2 = arith.constant 0 : index
    %1 = vector.load %arg2[%c0_1, %c0_2] : memref<64x128xf32, #tpu.memory_space<vmem>>, vector<64x128xf32>
    %cst = arith.constant dense<0.000000e+00> : vector<136x128xf32>
    %2 = tpu.matmul %0, %1, %cst {dimension_numbers = #tpu.dot_dimension_numbers<[1], [0], [0], [1], [0, 0, 1, 1], [], []>} : vector<136x64xf32>, vector<64x128xf32>, vector<136x128xf32> -> vector<136x128xf32>
    %c0_3 = arith.constant 0 : index
    %c0_4 = arith.constant 0 : index
    %3 = vector.load %arg3[%c0_3, %c0_4] : memref<1x128xf32, #tpu.memory_space<vmem>>, vector<1x128xf32>
    %4 = vector.broadcast %3 : vector<1x128xf32> to vector<136x128xf32>
    %5 = arith.addf %2, %4 : vector<136x128xf32>
    %c0_5 = arith.constant 0 : index
    %c0_6 = arith.constant 0 : index
    %6 = vector.load %arg4[%c0_5, %c0_6] : memref<136x128xf32, #tpu.memory_space<vmem>>, vector<136x128xf32>
    tpu.vector_store %arg4[%c0_5, %c0_6], %5 {strides = array<i32>} : memref<136x128xf32, #tpu.memory_space<vmem>>, vector<136x128xf32>,
    return
  }
  func.func @transform_0(%arg0: i32) -> (i32, i32) {
    %c0_i32 = arith.constant 0 : i32
    %c0_i32_0 = arith.constant 0 : i32
    return %arg0, %c0_i32 : i32, i32
  }
  func.func @transform_1(%arg0: i32) -> (i32, i32) {
    %c0_i32 = arith.constant 0 : i32
    %c0_i32_0 = arith.constant 0 : i32
    %c0_i32_1 = arith.constant 0 : i32
    return %c0_i32, %c0_i32_0 : i32, i32
  }
  func.func @transform_2(%arg0: i32) -> (i32, i32) {
    %c0_i32 = arith.constant 0 : i32
    %c0_i32_0 = arith.constant 0 : i32
    %c0_i32_1 = arith.constant 0 : i32
    return %c0_i32, %c0_i32_0 : i32, i32
  }
  func.func @transform_3(%arg0: i32) -> (i32, i32) {
    %c0_i32 = arith.constant 0 : i32
    %c0_i32_0 = arith.constant 0 : i32
    return %arg0, %c0_i32 : i32, i32
  }
}

module attributes {stable_mosaic.version = 11 : i64} {
  func.func @_linear_kernel(%arg0: i32, %arg1: memref<136x64xf32, #tpu.memory_space<vmem>>, %arg2: memref<64x128xf32, #tpu.memory_space<vmem>>, %arg3: memref<1x128xf32, #tpu.memory_space<vmem>>, %arg4: memref<136x128xf32, #tpu.memory_space<vmem>>) attributes {dimension_semantics = [#tpu.dimension_semantics<parallel>], iteration_bounds = array<i64: 2>, scalar_prefetch = 0 : i64, scratch_operands = 0 : i64, tpu.core_type = #tpu.core_type<tc>, window_params = [{transform_indices = @transform_0, window_bounds = array<i64: 136, 64>}, {pipeline_mode = #tpu.pipeline_mode<synchronous>, transform_indices = @transform_1, window_bounds = array<i64: 64, 128>}, {pipeline_mode = #tpu.pipeline_mode<synchronous>, transform_indices = @transform_2, window_bounds = array<i64: 1, 128>}, {transform_indices = @transform_3, window_bounds = array<i64: 136, 128>}]} {
    %c0 = arith.constant 0 : index
    %c0_0 = arith.constant 0 : index
    %0 = vector.load %arg1[%c0, %c0_0] : memref<136x64xf32, #tpu.memory_space<vmem>>, vector<136x64xf32>
    %c0_1 = arith.constant 0 : index
    %c0_2 = arith.constant 0 : index
    %1 = vector.load %arg2[%c0_1, %c0_2] : memref<64x128xf32, #tpu.memory_space<vmem>>, vector<64x128xf32>
    %cst = arith.constant dense<0.000000e+00> : vector<136x128xf32>
    %2 = tpu.matmul %0, %1, %cst {dimension_numbers = #tpu.dot_dimension_numbers<[1], [0], [0], [1], [0, 0, 1, 1], [], []>} : vector<136x64xf32>, vector<64x128xf32>, vector<136x128xf32> -> vector<136x128xf32>
    %c0_3 = arith.constant 0 : index
    %c0_4 = arith.constant 0 : index
    %3 = vector.load %arg3[%c0_3, %c0_4] : memref<1x128xf32, #tpu.memory_space<vmem>>, vector<1x128xf32>
    %4 = vector.broadcast %3 : vector<1x128xf32> to vector<136x128xf32>
    %5 = arith.addf %2, %4 : vector<136x128xf32>
    %c0_5 = arith.constant 0 : index
    %c0_6 = arith.constant 0 : index
    %6 = vector.load %arg4[%c0_5, %c0_6] : memref<136x128xf32, #tpu.memory_space<vmem>>, vector<136x128xf32>
    tpu.vector_store %arg4[%c0_5, %c0_6], %5 {strides = array<i32>} : memref<136x128xf32, #tpu.memory_space<vmem>>, vector<136x128xf32>,
    return
  }
  func.func @transform_0(%arg0: i32) -> (i32, i32) {
    %c0_i32 = arith.constant 0 : i32
    %c0_i32_0 = arith.constant 0 : i32
    return %arg0, %c0_i32 : i32, i32
  }
  func.func @transform_1(%arg0: i32) -> (i32, i32) {
    %c0_i32 = arith.constant 0 : i32
    %c0_i32_0 = arith.constant 0 : i32
    %c0_i32_1 = arith.constant 0 : i32
    return %c0_i32, %c0_i32_0 : i32, i32
  }
  func.func @transform_2(%arg0: i32) -> (i32, i32) {
    %c0_i32 = arith.constant 0 : i32
    %c0_i32_0 = arith.constant 0 : i32
    %c0_i32_1 = arith.constant 0 : i32
    return %c0_i32, %c0_i32_0 : i32, i32
  }
  func.func @transform_3(%arg0: i32) -> (i32, i32) {
    %c0_i32 = arith.constant 0 : i32
    %c0_i32_0 = arith.constant 0 : i32
    return %arg0, %c0_i32 : i32, i32
  }
}

</mosaic_0001>

<llo_original>
// kernel: tpu_custom_call.1
$region0: #{tpu_custom_call.1}
  #allocation0 [shape = 'u32[]', space=smem, size = 0x4, offset = 0x4, fixed_abs, tag = 'smem constant byte address 0x4 - core index']
  #allocation1 [shape = 'u32[144,128]{1,0:T(1,128)}', space=vmem, size = 0x12000, scoped, tag = 'internal scratch']
  %s0 = inlined_call_operand.vmem [shape: f32[260,64], index: 0, kind: input, shape index: {}]
  %s1 = inlined_call_operand.vmem [shape: f32[64,128], index: 1, kind: input, shape index: {}]
  %s2 = inlined_call_operand.vmem [shape: f32[1,128], index: 2, kind: input, shape index: {}]
  %s3 = inlined_call_operand.hbm [shape: f32[260,128], index: 3, kind: output, shape index: {}]
  %s4 = sld [smem:[#allocation0]]
  $region45: #{tpu_custom_call.1} parent=0
    _
  %s6 = ssub.s32 1, %s4
  %s7 = scalar_select 0, %s6, %s4
  $region1: #{tpu_custom_call.1} parent=0
    #allocation2 [shape = 'u8[139264]{0}', space=vmem, size = 0x22000, scoped, tag = 'output window, operand 0']
    #allocation3 [shape = 's32[2]{0}', space=sflag, size = 0x8, scoped, tag = 'scoped memory for tpu_custom_call.1']
    %8 = vsyncpa [#allocation3], 0
    %s9 = scalar_lea.sflag [#allocation3], 1
    %10 = vsyncpa %s9, 0
    loop: start=0, step=1, limit=4
    $region2: #{tpu_custom_call.1} parent=1 // loop_pre_header
      _
    $region3: #{tpu_custom_call.1} parent=1 // loop_header
      %s12 = sphi 0, %s16
      %p13 = scmp.ge.s32.totalorder %s12, 4
      %s22 = sphi 0, %s24
      %s25 = sphi 0, %s22
      %s26 = sphi 0, %s25
      %s42 = sphi 0, %s26
      %s46 = sphi 0, %s46
      %s48 = sphi 0, %s46
      %s49 = sphi 0, %s48
      %s63 = sphi 0, %s49
      %s67 = sphi 0, %s67
      %s69 = sphi 0, %s67
      %s70 = sphi 0, %s69
      %s84 = sphi 0, %s70
      %s90 = sphi 0, %s92
      %s93 = sphi 0, %s90
      %s94 = sphi 0, %s93
      %s110 = sphi 0, %s94
    $region4: #{tpu_custom_call.1} parent=1 // loop_header_branch
      %15 = sbr.rel (%p13) target = $region8
    $region5: #{tpu_custom_call.1} parent=1 // loop_body
      %s17 = ssub.s32 %s12, 1
      %s18 = ssub.s32 %s12, 2
      %s19 = sadd.s32 %s12, 1
      %s20 = ssub.s32 %s12, %s19
      %p21 = scmp.eq.s32.totalorder %s20, 0
      %s23 = sadd.s32 %s22, 1
      %s24 = scalar_select %p21, %s22, %s23
      %p27 = pneg %p21
      %p28 = scmp.eq.s32.totalorder %s12, 1
      %p29 = por %p27, %p28
      %p30 = scmp.ne.s32.totalorder %s22, %s25
      %p31 = scmp.eq.s32.totalorder %s12, 0
      %p32 = por %p30, %p31
      %p33 = scmp.ne.s32.totalorder %s22, %s25
      %p34 = scmp.eq.s32.totalorder %s17, 1
      %p35 = por %p33, %p34
      %p36 = scmp.ne.s32.totalorder %s25, %s26
      %p37 = scmp.eq.s32.totalorder %s17, 0
      %p38 = por %p36, %p37
      %p39 = scmp.ne.s32.totalorder %s25, %s26
      %p40 = scmp.eq.s32.totalorder %s18, 1
      %p41 = por %p39, %p40
      %p43 = scmp.ne.s32.totalorder %s26, %s42
      %p44 = scmp.eq.s32.totalorder %s18, 0
      %p45 = por %p43, %p44
      %s47 = sadd.s32 %s46, 1
      %p50 = scmp.eq.s32.totalorder %s12, 1
      %p51 = scmp.ne.s32.totalorder %s46, %s48
      %p52 = scmp.eq.s32.totalorder %s12, 0
      %p53 = por %p51, %p52
      %p54 = scmp.ne.s32.totalorder %s46, %s48
      %p55 = scmp.eq.s32.totalorder %s17, 1
      %p56 = por %p54, %p55
      %p57 = scmp.ne.s32.totalorder %s48, %s49
      %p58 = scmp.eq.s32.totalorder %s17, 0
      %p59 = por %p57, %p58
      %p60 = scmp.ne.s32.totalorder %s48, %s49
      %p61 = scmp.eq.s32.totalorder %s18, 1
      %p62 = por %p60, %p61
      %p64 = scmp.ne.s32.totalorder %s49, %s63
      %p65 = scmp.eq.s32.totalorder %s18, 0
      %p66 = por %p64, %p65
      %s68 = sadd.s32 %s67, 1
      %p71 = scmp.eq.s32.totalorder %s12, 1
      %p72 = scmp.ne.s32.totalorder %s67, %s69
      %p73 = scmp.eq.s32.totalorder %s12, 0
      %p74 = por %p72, %p73
      %p75 = scmp.ne.s32.totalorder %s67, %s69
      %p76 = scmp.eq.s32.totalorder %s17, 1
      %p77 = por %p75, %p76
      %p78 = scmp.ne.s32.totalorder %s69, %s70
      %p79 = scmp.eq.s32.totalorder %s17, 0
      %p80 = por %p78, %p79
      %p81 = scmp.ne.s32.totalorder %s69, %s70
      %p82 = scmp.eq.s32.totalorder %s18, 1
      %p83 = por %p81, %p82
      %p85 = scmp.ne.s32.totalorder %s70, %s84
      %p86 = scmp.eq.s32.totalorder %s18, 0
      %p87 = por %p85, %p86
      %s88 = ssub.s32 %s12, %s19
      %p89 = scmp.eq.s32.totalorder %s88, 0
      %s91 = sadd.s32 %s90, 1
      %s92 = scalar_select %p89, %s90, %s91
      %p95 = pneg %p89
      %p96 = scmp.eq.s32.totalorder %s12, 1
      %p97 = por %p95, %p96
      %p98 = scmp.ne.s32.totalorder %s90, %s93
      %p99 = scmp.eq.s32.totalorder %s12, 0
      %p100 = por %p98, %p99
      %p101 = scmp.ne.s32.totalorder %s90, %s93
      %p102 = scmp.eq.s32.totalorder %s17, 1
      %p103 = por %p101, %p102
      %p104 = scmp.ne.s32.totalorder %s93, %s94
      %p105 = scmp.eq.s32.totalorder %s17, 0
      %p106 = por %p104, %p105
      %p107 = scmp.ne.s32.totalorder %s93, %s94
      %p108 = scmp.eq.s32.totalorder %s18, 1
      %p109 = por %p107, %p108
      %p111 = scmp.ne.s32.totalorder %s94, %s110
      %p112 = scmp.eq.s32.totalorder %s18, 0
      %p113 = por %p111, %p112
      %p114 = scmp.le.s32.totalorder 1, %s12
      %p115 = scmp.lt.s32.totalorder %s12, 3
      %p116 = pnand %p114, %p115
      %p117 = pneg %p116
      // Predicated region
      $region9: #{tpu_custom_call.1} parent=5 // pred_check
        _
      $region10: #{tpu_custom_call.1} parent=5 // pred_check_branch
        %119 = sbr.rel (%p116) target = $region12
      $region11: #{tpu_custom_call.1} parent=5 // pred_region
        %s120 = ssub.s32 %s12, 1
        // Predicated region
        $region13: #{tpu_custom_call.1} parent=11 // pred_check
          %p121 = pneg %p59
        $region14: #{tpu_custom_call.1} parent=11 // pred_check_branch
          %123 = sbr.rel (%p121) target = $region16
        $region15: #{tpu_custom_call.1} parent=11 // pred_region
          _
        $region16: #{tpu_custom_call.1} parent=11 // pred_fallthru
          _
        // Predicated region
        $region17: #{tpu_custom_call.1} parent=11 // pred_check
          %p124 = pneg %p80
        $region18: #{tpu_custom_call.1} parent=11 // pred_check_branch
          %126 = sbr.rel (%p124) target = $region20
        $region19: #{tpu_custom_call.1} parent=11 // pred_region
          _
        $region20: #{tpu_custom_call.1} parent=11 // pred_fallthru
          _
      $region12: #{tpu_custom_call.1} parent=5 // pred_fallthru
        _
      %p127 = scmp.lt.s32.totalorder %s12, 2
      // Predicated region
      $region21: #{tpu_custom_call.1} parent=5 // pred_check
        %p128 = pneg %p127
      $region22: #{tpu_custom_call.1} parent=5 // pred_check_branch
        %130 = sbr.rel (%p128) target = $region24
      $region23: #{tpu_custom_call.1} parent=5 // pred_region
        // Predicated region
        $region25: #{tpu_custom_call.1} parent=23 // pred_check
          %p131 = pneg %p32
        $region26: #{tpu_custom_call.1} parent=23 // pred_check_branch
          %133 = sbr.rel (%p131) target = $region28
        $region27: #{tpu_custom_call.1} parent=23 // pred_region
          %s134 = smul.u32 17, %s12
          %s135 = ssub.s32 33, %s134
          %p136 = scmp.lt.s32.totalorder %s135, 17
          %s137 = scalar_select %p136, %s135, 17
          %s138 = smul.u32 128, %s137
          %p139 = scmp.lt.s32.totalorder %s134, 32
          %s140 = scalar_select %p139, %s134, 32
          %s141 = smul.addr %s140, 8
          %s142 = scalar_lea.vmem %s0, %s141
          %s143 = smul.u32 17, %s12
          %s144 = ssub.s32 33, %s143
          %p145 = scmp.lt.s32.totalorder %s144, 17
          %s146 = scalar_select %p145, %s144, 17
          %s147 = smul.u32 128, %s146
        $region28: #{tpu_custom_call.1} parent=23 // pred_fallthru
          _
      $region24: #{tpu_custom_call.1} parent=5 // pred_fallthru
        _
      %p148 = scmp.le.s32.totalorder 1, %s12
      %p149 = scmp.lt.s32.totalorder %s12, 3
      %p150 = pnand %p148, %p149
      %p151 = pneg %p150
      // Predicated region
      $region29: #{tpu_custom_call.1} parent=5 // pred_check
        _
      $region30: #{tpu_custom_call.1} parent=5 // pred_check_branch
        %153 = sbr.rel (%p150) target = $region32
      $region31: #{tpu_custom_call.1} parent=5 // pred_region
        %s154 = ssub.s32 %s12, 1
        %s155 = smul.u32 17, %s17
        %s156 = ssub.s32 33, %s155
        %p157 = scmp.lt.s32.totalorder %s156, 17
        %s158 = scalar_select %p157, %s156, 17
        %s159 = smul.u32 128, %s158
        %p160 = scmp.lt.s32.totalorder %s155, 32
        %s161 = scalar_select %p160, %s155, 32
        %s162 = smul.addr %s161, 8
        %s163 = scalar_lea.vmem %s0, %s162
        %p164 = pneg %p38
        %p165 = pneg %p35
        %p166 = pneg %p59
        %p167 = pneg %p56
        %p168 = pneg %p80
        %p169 = pneg %p77
        %p170 = pneg %p106
        %p171 = pneg %p103
        %s172 = sand.u32 %s93, 1
        %s173 = scalar_lea.sflag [#allocation3], %s172
        %s174 = sand.u32 %s93, 1
        %s175 = smul.addr %s174, 136
        %s176 = scalar_lea.vmem [#allocation2], %s175
        %s177 = smul.u32 17, %s17
        %s178 = ssub.s32 33, %s177
        %p179 = scmp.lt.s32.totalorder %s178, 17
        %s180 = scalar_select %p179, %s178, 17
        %s181 = smul.u32 128, %s180
        %p182 = scmp.lt.s32.totalorder %s177, 32
        %s183 = scalar_select %p182, %s177, 32
        %s184 = smul.addr %s183, 8
        %s185 = scalar_lea.vmem %s0, %s184
        %s186 = smul.u32 17, %s17
        %s187 = ssub.s32 33, %s186
        %p188 = scmp.lt.s32.totalorder %s187, 17
        %s189 = scalar_select %p188, %s187, 17
        %s190 = smul.u32 128, %s189
        %s191 = smul.u32 17, %s17
        %s192 = ssub.s32 33, %s191
        %p193 = scmp.lt.s32.totalorder %s192, 17
        %s194 = scalar_select %p193, %s192, 17
        %s195 = smul.u32 128, %s194
        %v196 = vld [vmem:[%s185] sm:$0xff]
        %v197 = vld [vmem:[%s185 + $0x8] sm:$0xff]
        %v198 = vld [vmem:[%s185 + $0x10] sm:$0xff]
        %v199 = vld [vmem:[%s185 + $0x18] sm:$0xff]
        %v200 = vld [vmem:[%s185 + $0x20] sm:$0xff]
        %v201 = vld [vmem:[%s185 + $0x28] sm:$0xff]
        %v202 = vld [vmem:[%s185 + $0x30] sm:$0xff]
        %v203 = vld [vmem:[%s185 + $0x38] sm:$0xff]
        %v204 = vld [vmem:[%s185 + $0x40] sm:$0xff]
        %v205 = vld [vmem:[%s185 + $0x48] sm:$0xff]
        %v206 = vld [vmem:[%s185 + $0x50] sm:$0xff]
        %v207 = vld [vmem:[%s185 + $0x58] sm:$0xff]
        %v208 = vld [vmem:[%s185 + $0x60] sm:$0xff]
        %v209 = vld [vmem:[%s185 + $0x68] sm:$0xff]
        %v210 = vld [vmem:[%s185 + $0x70] sm:$0xff]
        %v211 = vld [vmem:[%s185 + $0x78] sm:$0xff]
        %v212 = vld [vmem:[%s185 + $0x80] sm:$0xff]
        %v213 = vld [vmem:[%s1] sm:$0xff]
        %v214 = vld [vmem:[%s1 + $0x8] sm:$0xff]
        %v215 = vld [vmem:[%s1 + $0x10] sm:$0xff]
        %v216 = vld [vmem:[%s1 + $0x18] sm:$0xff]
        %v217 = vld [vmem:[%s1 + $0x20] sm:$0xff]
        %v218 = vld [vmem:[%s1 + $0x28] sm:$0xff]
        %v219 = vld [vmem:[%s1 + $0x30] sm:$0xff]
        %v220 = vld [vmem:[%s1 + $0x38] sm:$0xff]
        %v221 = vld [vmem:[%s2] sm:$0x1]
        %v223 = vlaneseq
        %v224 = vshrl.u32 %v223, 7
        %v225 = vsub.s32 0, %v224
        %v226 = vrot.slane %v221, %v225
        %vm228 = vcmask 523264
        %v230 = vsel %vm228, %v196, 0
        %v233 = vsel %vm228, %v197, 0
        %v236 = vsel %vm228, %v198, 0
        %v239 = vsel %vm228, %v199, 0
        %v242 = vsel %vm228, %v200, 0
        %v245 = vsel %vm228, %v201, 0
        %v248 = vsel %vm228, %v202, 0
        %v251 = vsel %vm228, %v203, 0
        %v254 = vsel %vm228, %v204, 0
        %v257 = vsel %vm228, %v205, 0
        %v260 = vsel %vm228, %v206, 0
        %v263 = vsel %vm228, %v207, 0
        %v266 = vsel %vm228, %v208, 0
        %v269 = vsel %vm228, %v209, 0
        %v272 = vsel %vm228, %v210, 0
        %v275 = vsel %vm228, %v211, 0
        %v278 = vsel %vm228, %v212, 0
        %280 = vmatprep.subr.mxu0 0.0
        %281 = vmatpush1.msra.mxu0 %v213
        %282 = vmatprep.subr.mxu0 0.0
        %283 = vmatpush1.msra.mxu0 %v214
        %284 = vmatprep.subr.mxu0 0.0
        %285 = vmatpush1.msra.mxu0 %v215
        %286 = vmatprep.subr.mxu0 0.0
        %287 = vmatpush1.msra.mxu0 %v216
        %288 = vmatprep.subr.mxu0 0.0
        %289 = vmatpush1.msra.mxu0 %v217
        %290 = vmatprep.subr.mxu0 0.0
        %291 = vmatpush1.msra.mxu0 %v218
        %292 = vmatprep.subr.mxu0 0.0
        %293 = vmatpush1.msra.mxu0 %v219
        %294 = vmatprep.subr.mxu0 0.0
        %295 = vmatpush1.msra.mxu0 %v220
        %296 = vmatprep.subr.mxu0 0.0
        %297 = vmatpush1.msra.mxu0 0.0
        %298 = vmatprep.subr.mxu0 0.0
        %299 = vmatpush1.msra.mxu0 0.0
        %300 = vmatprep.subr.mxu0 0.0
        %301 = vmatpush1.msra.mxu0 0.0
        %302 = vmatprep.subr.mxu0 0.0
        %303 = vmatpush1.msra.mxu0 0.0
        %304 = vmatprep.subr.mxu0 0.0
        %305 = vmatpush1.msra.mxu0 0.0
        %306 = vmatprep.subr.mxu0 0.0
        %307 = vmatpush1.msra.mxu0 0.0
        %308 = vmatprep.subr.mxu0 0.0
        %309 = vmatpush1.msra.mxu0 0.0
        %310 = vmatprep.subr.mxu0 0.0
        %311 = vmatpush1.msra.mxu0 0.0
        %312 = vmatprep.subr.mxu0 0.0
        %313 = vmatpush1.msra.mxu0 0.0
        %314 = vmatprep.subr.mxu0 0.0
        %315 = vmatpush1.msra.mxu0 0.0
        %316 = vmatprep.subr.mxu0 0.0
        %317 = vmatpush1.msra.mxu0 0.0
        %318 = vmatprep.subr.mxu0 0.0
        %319 = vmatpush1.msra.mxu0 0.0
        %320 = vmatprep.subr.mxu0 0.0
        %321 = vmatpush1.msra.mxu0 0.0
        %322 = vmatprep.subr.mxu0 0.0
        %323 = vmatpush1.msra.mxu0 0.0
        %324 = vmatprep.subr.mxu0 0.0
        %325 = vmatpush1.msra.mxu0 0.0
        %326 = vmatprep.subr.mxu0 0.0
        %327 = vmatpush1.msra.mxu0 0.0
        %328 = vmatprep.subr.mxu0 0.0
        %329 = vmatpush1.msra.mxu0 0.0
        %330 = vmatprep.subr.mxu0 0.0
        %331 = vmatpush1.msra.mxu0 0.0
        %332 = vmatprep.subr.mxu0 0.0
        %333 = vmatpush1.msra.mxu0 0.0
        %334 = vmatprep.subr.mxu0 0.0
        %335 = vmatpush1.msra.mxu0 0.0
        %336 = vmatprep.subr.mxu0 0.0
        %337 = vmatpush1.msra.mxu0 0.0
        %338 = vmatprep.subr.mxu0 0.0
        %339 = vmatpush1.msra.mxu0 0.0
        %340 = vmatprep.subr.mxu0 0.0
        %341 = vmatpush1.msra.mxu0 0.0
        %342 = vmatprep.subr.mxu0 0.0
        %343 = vmatpush1.msra.mxu0 0.0
        %344 = vmatprep.mubr.f32.mxu0 0.0
        %345 = vmatmul.mubr.f32.gmra.mrb[0].mxu0 %v230
        %v346 = vpop.f32.mrb[0].mxu0
        %v347 = vadd.f32 %v226, %v346
        %v348 = vpop.f32.mrb[0].mxu0
        %349 = vmatprep.mubr.f32.mxu0 0.0
        %350 = vmatmul.mubr.f32.gmra.mrb[0].mxu0 %v233
        %v351 = vpop.f32.mrb[0].mxu0
        %v352 = vadd.f32 %v226, %v351
        %v353 = vpop.f32.mrb[0].mxu0
        %354 = vmatprep.mubr.f32.mxu0 0.0
        %355 = vmatmul.mubr.f32.gmra.mrb[0].mxu0 %v236
        %v356 = vpop.f32.mrb[0].mxu0
        %v357 = vadd.f32 %v226, %v356
        %v358 = vpop.f32.mrb[0].mxu0
        %359 = vmatprep.mubr.f32.mxu0 0.0
        %360 = vmatmul.mubr.f32.gmra.mrb[0].mxu0 %v239
        %v361 = vpop.f32.mrb[0].mxu0
        %v362 = vadd.f32 %v226, %v361
        %v363 = vpop.f32.mrb[0].mxu0
        %364 = vmatprep.mubr.f32.mxu0 0.0
        %365 = vmatmul.mubr.f32.gmra.mrb[0].mxu0 %v242
        %v366 = vpop.f32.mrb[0].mxu0
        %v367 = vadd.f32 %v226, %v366
        %v368 = vpop.f32.mrb[0].mxu0
        %369 = vmatprep.mubr.f32.mxu0 0.0
        %370 = vmatmul.mubr.f32.gmra.mrb[0].mxu0 %v245
        %v371 = vpop.f32.mrb[0].mxu0
        %v372 = vadd.f32 %v226, %v371
        %v373 = vpop.f32.mrb[0].mxu0
        %374 = vmatprep.mubr.f32.mxu0 0.0
        %375 = vmatmul.mubr.f32.gmra.mrb[0].mxu0 %v248
        %v376 = vpop.f32.mrb[0].mxu0
        %v377 = vadd.f32 %v226, %v376
        %v378 = vpop.f32.mrb[0].mxu0
        %379 = vmatprep.mubr.f32.mxu0 0.0
        %380 = vmatmul.mubr.f32.gmra.mrb[0].mxu0 %v251
        %v381 = vpop.f32.mrb[0].mxu0
        %v382 = vadd.f32 %v226, %v381
        %v383 = vpop.f32.mrb[0].mxu0
        %384 = vmatprep.mubr.f32.mxu0 0.0
        %385 = vmatmul.mubr.f32.gmra.mrb[0].mxu0 %v254
        %v386 = vpop.f32.mrb[0].mxu0
        %v387 = vadd.f32 %v226, %v386
        %v388 = vpop.f32.mrb[0].mxu0
        %389 = vmatprep.mubr.f32.mxu0 0.0
        %390 = vmatmul.mubr.f32.gmra.mrb[0].mxu0 %v257
        %v391 = vpop.f32.mrb[0].mxu0
        %v392 = vadd.f32 %v226, %v391
        %v393 = vpop.f32.mrb[0].mxu0
        %394 = vmatprep.mubr.f32.mxu0 0.0
        %395 = vmatmul.mubr.f32.gmra.mrb[0].mxu0 %v260
        %v396 = vpop.f32.mrb[0].mxu0
        %v397 = vadd.f32 %v226, %v396
        %v398 = vpop.f32.mrb[0].mxu0
        %399 = vmatprep.mubr.f32.mxu0 0.0
        %400 = vmatmul.mubr.f32.gmra.mrb[0].mxu0 %v263
        %v401 = vpop.f32.mrb[0].mxu0
        %v402 = vadd.f32 %v226, %v401
        %v403 = vpop.f32.mrb[0].mxu0
        %404 = vmatprep.mubr.f32.mxu0 0.0
        %405 = vmatmul.mubr.f32.gmra.mrb[0].mxu0 %v266
        %v406 = vpop.f32.mrb[0].mxu0
        %v407 = vadd.f32 %v226, %v406
        %v408 = vpop.f32.mrb[0].mxu0
        %409 = vmatprep.mubr.f32.mxu0 0.0
        %410 = vmatmul.mubr.f32.gmra.mrb[0].mxu0 %v269
        %v411 = vpop.f32.mrb[0].mxu0
        %v412 = vadd.f32 %v226, %v411
        %v413 = vpop.f32.mrb[0].mxu0
        %414 = vmatprep.mubr.f32.mxu0 0.0
        %415 = vmatmul.mubr.f32.gmra.mrb[0].mxu0 %v272
        %v416 = vpop.f32.mrb[0].mxu0
        %v417 = vadd.f32 %v226, %v416
        %v418 = vpop.f32.mrb[0].mxu0
        %419 = vmatprep.mubr.f32.mxu0 0.0
        %420 = vmatmul.mubr.f32.gmra.mrb[0].mxu0 %v275
        %v421 = vpop.f32.mrb[0].mxu0
        %v422 = vadd.f32 %v226, %v421
        %v423 = vpop.f32.mrb[0].mxu0
        %424 = vmatprep.mubr.f32.mxu0 0.0
        %425 = vmatmul.mubr.f32.gmra.mrb[0].mxu0 %v278
        %v426 = vpop.f32.mrb[0].mxu0
        %v427 = vadd.f32 %v226, %v426
        %v428 = vpop.f32.mrb[0].mxu0
        %429 = vdwg.mxu0
        %430 = vst [vmem:[%s176] sm:$0xff] %v347
        %431 = vst [vmem:[%s176 + $0x8] sm:$0xff] %v352
        %432 = vst [vmem:[%s176 + $0x10] sm:$0xff] %v357
        %433 = vst [vmem:[%s176 + $0x18] sm:$0xff] %v362
        %434 = vst [vmem:[%s176 + $0x20] sm:$0xff] %v367
        %435 = vst [vmem:[%s176 + $0x28] sm:$0xff] %v372
        %436 = vst [vmem:[%s176 + $0x30] sm:$0xff] %v377
        %437 = vst [vmem:[%s176 + $0x38] sm:$0xff] %v382
        %438 = vst [vmem:[%s176 + $0x40] sm:$0xff] %v387
        %439 = vst [vmem:[%s176 + $0x48] sm:$0xff] %v392
        %440 = vst [vmem:[%s176 + $0x50] sm:$0xff] %v397
        %441 = vst [vmem:[%s176 + $0x58] sm:$0xff] %v402
        %442 = vst [vmem:[%s176 + $0x60] sm:$0xff] %v407
        %443 = vst [vmem:[%s176 + $0x68] sm:$0xff] %v412
        %444 = vst [vmem:[%s176 + $0x70] sm:$0xff] %v417
        %445 = vst [vmem:[%s176 + $0x78] sm:$0xff] %v422
        %446 = vst [vmem:[%s176 + $0x80] sm:$0xff] %v427
        %s447 = sand.u32 %s93, 1
        %s448 = scalar_lea.sflag [#allocation3], %s447
        %s449 = sand.u32 %s93, 1
        %s450 = smul.addr %s449, 136
        %s451 = scalar_lea.vmem [#allocation2], %s450
        // Predicated region
        $region33: #{tpu_custom_call.1} parent=31 // pred_check
          %p452 = pneg %p103
        $region34: #{tpu_custom_call.1} parent=31 // pred_check_branch
          %454 = sbr.rel (%p452) target = $region36
        $region35: #{tpu_custom_call.1} parent=31 // pred_region
          %s455 = smul.u32 17, %s17
          %s456 = ssub.s32 33, %s455
          %p457 = scmp.lt.s32.totalorder %s456, 17
          %s458 = scalar_select %p457, %s456, 17
          %s459 = smul.u32 128, %s458
          %s461 = ssub.s32 2176, %s459
          %462 = vsyncadd %s448, %s461
          %p463 = scmp.ne.s32.totalorder 0, %s459
          %s464 = smul.addr %s455, 128
          %s465 = scalar_lea.hbm %s3, %s464
          %s466 = smul.u32 8, %s458
          %s467 = sshll.u32 %s451, 4
          %s468 = int_to_ptr.vmem [resolvable:$true] %s467
          %s469 = sshll.u32 %s466, 4
          %473 = dma.vmem_to_hbm [thread:$0]  (%p463), %s468, %s469, %s465, %s448, 128, 128, 8
        $region36: #{tpu_custom_call.1} parent=31 // pred_fallthru
          _
      $region32: #{tpu_custom_call.1} parent=5 // pred_fallthru
        _
      %p474 = scmp.le.s32.totalorder 2, %s12
      // Predicated region
      $region37: #{tpu_custom_call.1} parent=5 // pred_check
        %p475 = pneg %p474
      $region38: #{tpu_custom_call.1} parent=5 // pred_check_branch
        %477 = sbr.rel (%p475) target = $region40
      $region39: #{tpu_custom_call.1} parent=5 // pred_region
        %s478 = ssub.s32 %s12, 2
        // Predicated region
        $region41: #{tpu_custom_call.1} parent=39 // pred_check
          %p479 = pneg %p109
        $region42: #{tpu_custom_call.1} parent=39 // pred_check_branch
          %481 = sbr.rel (%p479) target = $region44
        $region43: #{tpu_custom_call.1} parent=39 // pred_region
          %s482 = sand.u32 %s94, 1
          %s483 = scalar_lea.sflag [#allocation3], %s482
          %s484 = sand.u32 %s94, 1
          %s485 = smul.addr %s484, 136
          %s486 = scalar_lea.vmem [#allocation2], %s485
          %487 = dma.done %s483, 2176
        $region44: #{tpu_custom_call.1} parent=39 // pred_fallthru
          _
      $region40: #{tpu_custom_call.1} parent=5 // pred_fallthru
        _
    $region6: #{tpu_custom_call.1} parent=1 // loop_footer
      %s16 = sadd.s32 1, %s12
    $region7: #{tpu_custom_call.1} parent=1 // loop_footer_branch
      %11 = sbr.rel target = $region3
    $region8: #{tpu_custom_call.1} parent=1 // loop_exit
      _
    %488 = vsyncpa [#allocation3], 1
    %s489 = scalar_lea.sflag [#allocation3], 1
    %490 = vsyncpa %s489, 1

// kernel: tpu_custom_call.1
$region0: #{tpu_custom_call.1}
  #allocation0 [shape = 'u32[]', space=smem, size = 0x4, offset = 0x4, fixed_abs, tag = 'smem constant byte address 0x4 - core index']
  #allocation1 [shape = 'u32[144,128]{1,0:T(1,128)}', space=vmem, size = 0x12000, scoped, tag = 'internal scratch']
  %s0 = inlined_call_operand.vmem [shape: f32[260,64], index: 0, kind: input, shape index: {}]
  %s1 = inlined_call_operand.vmem [shape: f32[64,128], index: 1, kind: input, shape index: {}]
  %s2 = inlined_call_operand.vmem [shape: f32[1,128], index: 2, kind: input, shape index: {}]
  %s3 = inlined_call_operand.hbm [shape: f32[260,128], index: 3, kind: output, shape index: {}]
  %s4 = sld [smem:[#allocation0]]
  $region45: #{tpu_custom_call.1} parent=0
    _
  %s6 = ssub.s32 1, %s4
  %s7 = scalar_select 0, %s6, %s4
  $region1: #{tpu_custom_call.1} parent=0
    #allocation2 [shape = 'u8[139264]{0}', space=vmem, size = 0x22000, scoped, tag = 'output window, operand 0']
    #allocation3 [shape = 's32[2]{0}', space=sflag, size = 0x8, scoped, tag = 'scoped memory for tpu_custom_call.1']
    %8 = vsyncpa [#allocation3], 0
    %s9 = scalar_lea.sflag [#allocation3], 1
    %10 = vsyncpa %s9, 0
    loop: start=0, step=1, limit=4
    $region2: #{tpu_custom_call.1} parent=1 // loop_pre_header
      _
    $region3: #{tpu_custom_call.1} parent=1 // loop_header
      %s12 = sphi 0, %s16
      %p13 = scmp.ge.s32.totalorder %s12, 4
      %s22 = sphi 0, %s24
      %s25 = sphi 0, %s22
      %s26 = sphi 0, %s25
      %s42 = sphi 0, %s26
      %s46 = sphi 0, %s46
      %s48 = sphi 0, %s46
      %s49 = sphi 0, %s48
      %s63 = sphi 0, %s49
      %s67 = sphi 0, %s67
      %s69 = sphi 0, %s67
      %s70 = sphi 0, %s69
      %s84 = sphi 0, %s70
      %s90 = sphi 0, %s92
      %s93 = sphi 0, %s90
      %s94 = sphi 0, %s93
      %s110 = sphi 0, %s94
    $region4: #{tpu_custom_call.1} parent=1 // loop_header_branch
      %15 = sbr.rel (%p13) target = $region8
    $region5: #{tpu_custom_call.1} parent=1 // loop_body
      %s17 = ssub.s32 %s12, 1
      %s18 = ssub.s32 %s12, 2
      %s19 = sadd.s32 %s12, 1
      %s20 = ssub.s32 %s12, %s19
      %p21 = scmp.eq.s32.totalorder %s20, 0
      %s23 = sadd.s32 %s22, 1
      %s24 = scalar_select %p21, %s22, %s23
      %p27 = pneg %p21
      %p28 = scmp.eq.s32.totalorder %s12, 1
      %p29 = por %p27, %p28
      %p30 = scmp.ne.s32.totalorder %s22, %s25
      %p31 = scmp.eq.s32.totalorder %s12, 0
      %p32 = por %p30, %p31
      %p33 = scmp.ne.s32.totalorder %s22, %s25
      %p34 = scmp.eq.s32.totalorder %s17, 1
      %p35 = por %p33, %p34
      %p36 = scmp.ne.s32.totalorder %s25, %s26
      %p37 = scmp.eq.s32.totalorder %s17, 0
      %p38 = por %p36, %p37
      %p39 = scmp.ne.s32.totalorder %s25, %s26
      %p40 = scmp.eq.s32.totalorder %s18, 1
      %p41 = por %p39, %p40
      %p43 = scmp.ne.s32.totalorder %s26, %s42
      %p44 = scmp.eq.s32.totalorder %s18, 0
      %p45 = por %p43, %p44
      %s47 = sadd.s32 %s46, 1
      %p50 = scmp.eq.s32.totalorder %s12, 1
      %p51 = scmp.ne.s32.totalorder %s46, %s48
      %p52 = scmp.eq.s32.totalorder %s12, 0
      %p53 = por %p51, %p52
      %p54 = scmp.ne.s32.totalorder %s46, %s48
      %p55 = scmp.eq.s32.totalorder %s17, 1
      %p56 = por %p54, %p55
      %p57 = scmp.ne.s32.totalorder %s48, %s49
      %p58 = scmp.eq.s32.totalorder %s17, 0
      %p59 = por %p57, %p58
      %p60 = scmp.ne.s32.totalorder %s48, %s49
      %p61 = scmp.eq.s32.totalorder %s18, 1
      %p62 = por %p60, %p61
      %p64 = scmp.ne.s32.totalorder %s49, %s63
      %p65 = scmp.eq.s32.totalorder %s18, 0
      %p66 = por %p64, %p65
      %s68 = sadd.s32 %s67, 1
      %p71 = scmp.eq.s32.totalorder %s12, 1
      %p72 = scmp.ne.s32.totalorder %s67, %s69
      %p73 = scmp.eq.s32.totalorder %s12, 0
      %p74 = por %p72, %p73
      %p75 = scmp.ne.s32.totalorder %s67, %s69
      %p76 = scmp.eq.s32.totalorder %s17, 1
      %p77 = por %p75, %p76
      %p78 = scmp.ne.s32.totalorder %s69, %s70
      %p79 = scmp.eq.s32.totalorder %s17, 0
      %p80 = por %p78, %p79
      %p81 = scmp.ne.s32.totalorder %s69, %s70
      %p82 = scmp.eq.s32.totalorder %s18, 1
      %p83 = por %p81, %p82
      %p85 = scmp.ne.s32.totalorder %s70, %s84
      %p86 = scmp.eq.s32.totalorder %s18, 0
      %p87 = por %p85, %p86
      %s88 = ssub.s32 %s12, %s19
      %p89 = scmp.eq.s32.totalorder %s88, 0
      %s91 = sadd.s32 %s90, 1
      %s92 = scalar_select %p89, %s90, %s91
      %p95 = pneg %p89
      %p96 = scmp.eq.s32.totalorder %s12, 1
      %p97 = por %p95, %p96
      %p98 = scmp.ne.s32.totalorder %s90, %s93
      %p99 = scmp.eq.s32.totalorder %s12, 0
      %p100 = por %p98, %p99
      %p101 = scmp.ne.s32.totalorder %s90, %s93
      %p102 = scmp.eq.s32.totalorder %s17, 1
      %p103 = por %p101, %p102
      %p104 = scmp.ne.s32.totalorder %s93, %s94
      %p105 = scmp.eq.s32.totalorder %s17, 0
      %p106 = por %p104, %p105
      %p107 = scmp.ne.s32.totalorder %s93, %s94
      %p108 = scmp.eq.s32.totalorder %s18, 1
      %p109 = por %p107, %p108
      %p111 = scmp.ne.s32.totalorder %s94, %s110
      %p112 = scmp.eq.s32.totalorder %s18, 0
      %p113 = por %p111, %p112
      %p114 = scmp.le.s32.totalorder 1, %s12
      %p115 = scmp.lt.s32.totalorder %s12, 3
      %p116 = pnand %p114, %p115
      %p117 = pneg %p116
      // Predicated region
      $region9: #{tpu_custom_call.1} parent=5 // pred_check
        _
      $region10: #{tpu_custom_call.1} parent=5 // pred_check_branch
        %119 = sbr.rel (%p116) target = $region12
      $region11: #{tpu_custom_call.1} parent=5 // pred_region
        %s120 = ssub.s32 %s12, 1
        // Predicated region
        $region13: #{tpu_custom_call.1} parent=11 // pred_check
          %p121 = pneg %p59
        $region14: #{tpu_custom_call.1} parent=11 // pred_check_branch
          %123 = sbr.rel (%p121) target = $region16
        $region15: #{tpu_custom_call.1} parent=11 // pred_region
          _
        $region16: #{tpu_custom_call.1} parent=11 // pred_fallthru
          _
        // Predicated region
        $region17: #{tpu_custom_call.1} parent=11 // pred_check
          %p124 = pneg %p80
        $region18: #{tpu_custom_call.1} parent=11 // pred_check_branch
          %126 = sbr.rel (%p124) target = $region20
        $region19: #{tpu_custom_call.1} parent=11 // pred_region
          _
        $region20: #{tpu_custom_call.1} parent=11 // pred_fallthru
          _
      $region12: #{tpu_custom_call.1} parent=5 // pred_fallthru
        _
      %p127 = scmp.lt.s32.totalorder %s12, 2
      // Predicated region
      $region21: #{tpu_custom_call.1} parent=5 // pred_check
        %p128 = pneg %p127
      $region22: #{tpu_custom_call.1} parent=5 // pred_check_branch
        %130 = sbr.rel (%p128) target = $region24
      $region23: #{tpu_custom_call.1} parent=5 // pred_region
        // Predicated region
        $region25: #{tpu_custom_call.1} parent=23 // pred_check
          %p131 = pneg %p32
        $region26: #{tpu_custom_call.1} parent=23 // pred_check_branch
          %133 = sbr.rel (%p131) target = $region28
        $region27: #{tpu_custom_call.1} parent=23 // pred_region
          %s134 = smul.u32 17, %s12
          %s135 = ssub.s32 33, %s134
          %p136 = scmp.lt.s32.totalorder %s135, 17
          %s137 = scalar_select %p136, %s135, 17
          %s138 = smul.u32 128, %s137
          %p139 = scmp.lt.s32.totalorder %s134, 32
          %s140 = scalar_select %p139, %s134, 32
          %s141 = smul.addr %s140, 8
          %s142 = scalar_lea.vmem %s0, %s141
          %s143 = smul.u32 17, %s12
          %s144 = ssub.s32 33, %s143
          %p145 = scmp.lt.s32.totalorder %s144, 17
          %s146 = scalar_select %p145, %s144, 17
          %s147 = smul.u32 128, %s146
        $region28: #{tpu_custom_call.1} parent=23 // pred_fallthru
          _
      $region24: #{tpu_custom_call.1} parent=5 // pred_fallthru
        _
      %p148 = scmp.le.s32.totalorder 1, %s12
      %p149 = scmp.lt.s32.totalorder %s12, 3
      %p150 = pnand %p148, %p149
      %p151 = pneg %p150
      // Predicated region
      $region29: #{tpu_custom_call.1} parent=5 // pred_check
        _
      $region30: #{tpu_custom_call.1} parent=5 // pred_check_branch
        %153 = sbr.rel (%p150) target = $region32
      $region31: #{tpu_custom_call.1} parent=5 // pred_region
        %s154 = ssub.s32 %s12, 1
        %s155 = smul.u32 17, %s17
        %s156 = ssub.s32 33, %s155
        %p157 = scmp.lt.s32.totalorder %s156, 17
        %s158 = scalar_select %p157, %s156, 17
        %s159 = smul.u32 128, %s158
        %p160 = scmp.lt.s32.totalorder %s155, 32
        %s161 = scalar_select %p160, %s155, 32
        %s162 = smul.addr %s161, 8
        %s163 = scalar_lea.vmem %s0, %s162
        %p164 = pneg %p38
        %p165 = pneg %p35
        %p166 = pneg %p59
        %p167 = pneg %p56
        %p168 = pneg %p80
        %p169 = pneg %p77
        %p170 = pneg %p106
        %p171 = pneg %p103
        %s172 = sand.u32 %s93, 1
        %s173 = scalar_lea.sflag [#allocation3], %s172
        %s174 = sand.u32 %s93, 1
        %s175 = smul.addr %s174, 136
        %s176 = scalar_lea.vmem [#allocation2], %s175
        %s177 = smul.u32 17, %s17
        %s178 = ssub.s32 33, %s177
        %p179 = scmp.lt.s32.totalorder %s178, 17
        %s180 = scalar_select %p179, %s178, 17
        %s181 = smul.u32 128, %s180
        %p182 = scmp.lt.s32.totalorder %s177, 32
        %s183 = scalar_select %p182, %s177, 32
        %s184 = smul.addr %s183, 8
        %s185 = scalar_lea.vmem %s0, %s184
        %s186 = smul.u32 17, %s17
        %s187 = ssub.s32 33, %s186
        %p188 = scmp.lt.s32.totalorder %s187, 17
        %s189 = scalar_select %p188, %s187, 17
        %s190 = smul.u32 128, %s189
        %s191 = smul.u32 17, %s17
        %s192 = ssub.s32 33, %s191
        %p193 = scmp.lt.s32.totalorder %s192, 17
        %s194 = scalar_select %p193, %s192, 17
        %s195 = smul.u32 128, %s194
        %v196 = vld [vmem:[%s185] sm:$0xff]
        %v197 = vld [vmem:[%s185 + $0x8] sm:$0xff]
        %v198 = vld [vmem:[%s185 + $0x10] sm:$0xff]
        %v199 = vld [vmem:[%s185 + $0x18] sm:$0xff]
        %v200 = vld [vmem:[%s185 + $0x20] sm:$0xff]
        %v201 = vld [vmem:[%s185 + $0x28] sm:$0xff]
        %v202 = vld [vmem:[%s185 + $0x30] sm:$0xff]
        %v203 = vld [vmem:[%s185 + $0x38] sm:$0xff]
        %v204 = vld [vmem:[%s185 + $0x40] sm:$0xff]
        %v205 = vld [vmem:[%s185 + $0x48] sm:$0xff]
        %v206 = vld [vmem:[%s185 + $0x50] sm:$0xff]
        %v207 = vld [vmem:[%s185 + $0x58] sm:$0xff]
        %v208 = vld [vmem:[%s185 + $0x60] sm:$0xff]
        %v209 = vld [vmem:[%s185 + $0x68] sm:$0xff]
        %v210 = vld [vmem:[%s185 + $0x70] sm:$0xff]
        %v211 = vld [vmem:[%s185 + $0x78] sm:$0xff]
        %v212 = vld [vmem:[%s185 + $0x80] sm:$0xff]
        %v213 = vld [vmem:[%s1] sm:$0xff]
        %v214 = vld [vmem:[%s1 + $0x8] sm:$0xff]
        %v215 = vld [vmem:[%s1 + $0x10] sm:$0xff]
        %v216 = vld [vmem:[%s1 + $0x18] sm:$0xff]
        %v217 = vld [vmem:[%s1 + $0x20] sm:$0xff]
        %v218 = vld [vmem:[%s1 + $0x28] sm:$0xff]
        %v219 = vld [vmem:[%s1 + $0x30] sm:$0xff]
        %v220 = vld [vmem:[%s1 + $0x38] sm:$0xff]
        %v221 = vld [vmem:[%s2] sm:$0x1]
        %v223 = vlaneseq
        %v224 = vshrl.u32 %v223, 7
        %v225 = vsub.s32 0, %v224
        %v226 = vrot.slane %v221, %v225
        %vm228 = vcmask 523264
        %v230 = vsel %vm228, %v196, 0
        %v233 = vsel %vm228, %v197, 0
        %v236 = vsel %vm228, %v198, 0
        %v239 = vsel %vm228, %v199, 0
        %v242 = vsel %vm228, %v200, 0
        %v245 = vsel %vm228, %v201, 0
        %v248 = vsel %vm228, %v202, 0
        %v251 = vsel %vm228, %v203, 0
        %v254 = vsel %vm228, %v204, 0
        %v257 = vsel %vm228, %v205, 0
        %v260 = vsel %vm228, %v206, 0
        %v263 = vsel %vm228, %v207, 0
        %v266 = vsel %vm228, %v208, 0
        %v269 = vsel %vm228, %v209, 0
        %v272 = vsel %vm228, %v210, 0
        %v275 = vsel %vm228, %v211, 0
        %v278 = vsel %vm228, %v212, 0
        %280 = vmatprep.subr.mxu0 0.0
        %281 = vmatpush1.msra.mxu0 %v213
        %282 = vmatprep.subr.mxu0 0.0
        %283 = vmatpush1.msra.mxu0 %v214
        %284 = vmatprep.subr.mxu0 0.0
        %285 = vmatpush1.msra.mxu0 %v215
        %286 = vmatprep.subr.mxu0 0.0
        %287 = vmatpush1.msra.mxu0 %v216
        %288 = vmatprep.subr.mxu0 0.0
        %289 = vmatpush1.msra.mxu0 %v217
        %290 = vmatprep.subr.mxu0 0.0
        %291 = vmatpush1.msra.mxu0 %v218
        %292 = vmatprep.subr.mxu0 0.0
        %293 = vmatpush1.msra.mxu0 %v219
        %294 = vmatprep.subr.mxu0 0.0
        %295 = vmatpush1.msra.mxu0 %v220
        %296 = vmatprep.subr.mxu0 0.0
        %297 = vmatpush1.msra.mxu0 0.0
        %298 = vmatprep.subr.mxu0 0.0
        %299 = vmatpush1.msra.mxu0 0.0
        %300 = vmatprep.subr.mxu0 0.0
        %301 = vmatpush1.msra.mxu0 0.0
        %302 = vmatprep.subr.mxu0 0.0
        %303 = vmatpush1.msra.mxu0 0.0
        %304 = vmatprep.subr.mxu0 0.0
        %305 = vmatpush1.msra.mxu0 0.0
        %306 = vmatprep.subr.mxu0 0.0
        %307 = vmatpush1.msra.mxu0 0.0
        %308 = vmatprep.subr.mxu0 0.0
        %309 = vmatpush1.msra.mxu0 0.0
        %310 = vmatprep.subr.mxu0 0.0
        %311 = vmatpush1.msra.mxu0 0.0
        %312 = vmatprep.subr.mxu0 0.0
        %313 = vmatpush1.msra.mxu0 0.0
        %314 = vmatprep.subr.mxu0 0.0
        %315 = vmatpush1.msra.mxu0 0.0
        %316 = vmatprep.subr.mxu0 0.0
        %317 = vmatpush1.msra.mxu0 0.0
        %318 = vmatprep.subr.mxu0 0.0
        %319 = vmatpush1.msra.mxu0 0.0
        %320 = vmatprep.subr.mxu0 0.0
        %321 = vmatpush1.msra.mxu0 0.0
        %322 = vmatprep.subr.mxu0 0.0
        %323 = vmatpush1.msra.mxu0 0.0
        %324 = vmatprep.subr.mxu0 0.0
        %325 = vmatpush1.msra.mxu0 0.0
        %326 = vmatprep.subr.mxu0 0.0
        %327 = vmatpush1.msra.mxu0 0.0
        %328 = vmatprep.subr.mxu0 0.0
        %329 = vmatpush1.msra.mxu0 0.0
        %330 = vmatprep.subr.mxu0 0.0
        %331 = vmatpush1.msra.mxu0 0.0
        %332 = vmatprep.subr.mxu0 0.0
        %333 = vmatpush1.msra.mxu0 0.0
        %334 = vmatprep.subr.mxu0 0.0
        %335 = vmatpush1.msra.mxu0 0.0
        %336 = vmatprep.subr.mxu0 0.0
        %337 = vmatpush1.msra.mxu0 0.0
        %338 = vmatprep.subr.mxu0 0.0
        %339 = vmatpush1.msra.mxu0 0.0
        %340 = vmatprep.subr.mxu0 0.0
        %341 = vmatpush1.msra.mxu0 0.0
        %342 = vmatprep.subr.mxu0 0.0
        %343 = vmatpush1.msra.mxu0 0.0
        %344 = vmatprep.mubr.f32.mxu0 0.0
        %345 = vmatmul.mubr.f32.gmra.mrb[0].mxu0 %v230
        %v346 = vpop.f32.mrb[0].mxu0
        %v347 = vadd.f32 %v226, %v346
        %v348 = vpop.f32.mrb[0].mxu0
        %349 = vmatprep.mubr.f32.mxu0 0.0
        %350 = vmatmul.mubr.f32.gmra.mrb[0].mxu0 %v233
        %v351 = vpop.f32.mrb[0].mxu0
        %v352 = vadd.f32 %v226, %v351
        %v353 = vpop.f32.mrb[0].mxu0
        %354 = vmatprep.mubr.f32.mxu0 0.0
        %355 = vmatmul.mubr.f32.gmra.mrb[0].mxu0 %v236
        %v356 = vpop.f32.mrb[0].mxu0
        %v357 = vadd.f32 %v226, %v356
        %v358 = vpop.f32.mrb[0].mxu0
        %359 = vmatprep.mubr.f32.mxu0 0.0
        %360 = vmatmul.mubr.f32.gmra.mrb[0].mxu0 %v239
        %v361 = vpop.f32.mrb[0].mxu0
        %v362 = vadd.f32 %v226, %v361
        %v363 = vpop.f32.mrb[0].mxu0
        %364 = vmatprep.mubr.f32.mxu0 0.0
        %365 = vmatmul.mubr.f32.gmra.mrb[0].mxu0 %v242
        %v366 = vpop.f32.mrb[0].mxu0
        %v367 = vadd.f32 %v226, %v366
        %v368 = vpop.f32.mrb[0].mxu0
        %369 = vmatprep.mubr.f32.mxu0 0.0
        %370 = vmatmul.mubr.f32.gmra.mrb[0].mxu0 %v245
        %v371 = vpop.f32.mrb[0].mxu0
        %v372 = vadd.f32 %v226, %v371
        %v373 = vpop.f32.mrb[0].mxu0
        %374 = vmatprep.mubr.f32.mxu0 0.0
        %375 = vmatmul.mubr.f32.gmra.mrb[0].mxu0 %v248
        %v376 = vpop.f32.mrb[0].mxu0
        %v377 = vadd.f32 %v226, %v376
        %v378 = vpop.f32.mrb[0].mxu0
        %379 = vmatprep.mubr.f32.mxu0 0.0
        %380 = vmatmul.mubr.f32.gmra.mrb[0].mxu0 %v251
        %v381 = vpop.f32.mrb[0].mxu0
        %v382 = vadd.f32 %v226, %v381
        %v383 = vpop.f32.mrb[0].mxu0
        %384 = vmatprep.mubr.f32.mxu0 0.0
        %385 = vmatmul.mubr.f32.gmra.mrb[0].mxu0 %v254
        %v386 = vpop.f32.mrb[0].mxu0
        %v387 = vadd.f32 %v226, %v386
        %v388 = vpop.f32.mrb[0].mxu0
        %389 = vmatprep.mubr.f32.mxu0 0.0
        %390 = vmatmul.mubr.f32.gmra.mrb[0].mxu0 %v257
        %v391 = vpop.f32.mrb[0].mxu0
        %v392 = vadd.f32 %v226, %v391
        %v393 = vpop.f32.mrb[0].mxu0
        %394 = vmatprep.mubr.f32.mxu0 0.0
        %395 = vmatmul.mubr.f32.gmra.mrb[0].mxu0 %v260
        %v396 = vpop.f32.mrb[0].mxu0
        %v397 = vadd.f32 %v226, %v396
        %v398 = vpop.f32.mrb[0].mxu0
        %399 = vmatprep.mubr.f32.mxu0 0.0
        %400 = vmatmul.mubr.f32.gmra.mrb[0].mxu0 %v263
        %v401 = vpop.f32.mrb[0].mxu0
        %v402 = vadd.f32 %v226, %v401
        %v403 = vpop.f32.mrb[0].mxu0
        %404 = vmatprep.mubr.f32.mxu0 0.0
        %405 = vmatmul.mubr.f32.gmra.mrb[0].mxu0 %v266
        %v406 = vpop.f32.mrb[0].mxu0
        %v407 = vadd.f32 %v226, %v406
        %v408 = vpop.f32.mrb[0].mxu0
        %409 = vmatprep.mubr.f32.mxu0 0.0
        %410 = vmatmul.mubr.f32.gmra.mrb[0].mxu0 %v269
        %v411 = vpop.f32.mrb[0].mxu0
        %v412 = vadd.f32 %v226, %v411
        %v413 = vpop.f32.mrb[0].mxu0
        %414 = vmatprep.mubr.f32.mxu0 0.0
        %415 = vmatmul.mubr.f32.gmra.mrb[0].mxu0 %v272
        %v416 = vpop.f32.mrb[0].mxu0
        %v417 = vadd.f32 %v226, %v416
        %v418 = vpop.f32.mrb[0].mxu0
        %419 = vmatprep.mubr.f32.mxu0 0.0
        %420 = vmatmul.mubr.f32.gmra.mrb[0].mxu0 %v275
        %v421 = vpop.f32.mrb[0].mxu0
        %v422 = vadd.f32 %v226, %v421
        %v423 = vpop.f32.mrb[0].mxu0
        %424 = vmatprep.mubr.f32.mxu0 0.0
        %425 = vmatmul.mubr.f32.gmra.mrb[0].mxu0 %v278
        %v426 = vpop.f32.mrb[0].mxu0
        %v427 = vadd.f32 %v226, %v426
        %v428 = vpop.f32.mrb[0].mxu0
        %429 = vdwg.mxu0
        %430 = vst [vmem:[%s176] sm:$0xff] %v347
        %431 = vst [vmem:[%s176 + $0x8] sm:$0xff] %v352
        %432 = vst [vmem:[%s176 + $0x10] sm:$0xff] %v357
        %433 = vst [vmem:[%s176 + $0x18] sm:$0xff] %v362
        %434 = vst [vmem:[%s176 + $0x20] sm:$0xff] %v367
        %435 = vst [vmem:[%s176 + $0x28] sm:$0xff] %v372
        %436 = vst [vmem:[%s176 + $0x30] sm:$0xff] %v377
        %437 = vst [vmem:[%s176 + $0x38] sm:$0xff] %v382
        %438 = vst [vmem:[%s176 + $0x40] sm:$0xff] %v387
        %439 = vst [vmem:[%s176 + $0x48] sm:$0xff] %v392
        %440 = vst [vmem:[%s176 + $0x50] sm:$0xff] %v397
        %441 = vst [vmem:[%s176 + $0x58] sm:$0xff] %v402
        %442 = vst [vmem:[%s176 + $0x60] sm:$0xff] %v407
        %443 = vst [vmem:[%s176 + $0x68] sm:$0xff] %v412
        %444 = vst [vmem:[%s176 + $0x70] sm:$0xff] %v417
        %445 = vst [vmem:[%s176 + $0x78] sm:$0xff] %v422
        %446 = vst [vmem:[%s176 + $0x80] sm:$0xff] %v427
        %s447 = sand.u32 %s93, 1
        %s448 = scalar_lea.sflag [#allocation3], %s447
        %s449 = sand.u32 %s93, 1
        %s450 = smul.addr %s449, 136
        %s451 = scalar_lea.vmem [#allocation2], %s450
        // Predicated region
        $region33: #{tpu_custom_call.1} parent=31 // pred_check
          %p452 = pneg %p103
        $region34: #{tpu_custom_call.1} parent=31 // pred_check_branch
          %454 = sbr.rel (%p452) target = $region36
        $region35: #{tpu_custom_call.1} parent=31 // pred_region
          %s455 = smul.u32 17, %s17
          %s456 = ssub.s32 33, %s455
          %p457 = scmp.lt.s32.totalorder %s456, 17
          %s458 = scalar_select %p457, %s456, 17
          %s459 = smul.u32 128, %s458
          %s461 = ssub.s32 2176, %s459
          %462 = vsyncadd %s448, %s461
          %p463 = scmp.ne.s32.totalorder 0, %s459
          %s464 = smul.addr %s455, 128
          %s465 = scalar_lea.hbm %s3, %s464
          %s466 = smul.u32 8, %s458
          %s467 = sshll.u32 %s451, 4
          %s468 = int_to_ptr.vmem [resolvable:$true] %s467
          %s469 = sshll.u32 %s466, 4
          %473 = dma.vmem_to_hbm [thread:$0]  (%p463), %s468, %s469, %s465, %s448, 128, 128, 8
        $region36: #{tpu_custom_call.1} parent=31 // pred_fallthru
          _
      $region32: #{tpu_custom_call.1} parent=5 // pred_fallthru
        _
      %p474 = scmp.le.s32.totalorder 2, %s12
      // Predicated region
      $region37: #{tpu_custom_call.1} parent=5 // pred_check
        %p475 = pneg %p474
      $region38: #{tpu_custom_call.1} parent=5 // pred_check_branch
        %477 = sbr.rel (%p475) target = $region40
      $region39: #{tpu_custom_call.1} parent=5 // pred_region
        %s478 = ssub.s32 %s12, 2
        // Predicated region
        $region41: #{tpu_custom_call.1} parent=39 // pred_check
          %p479 = pneg %p109
        $region42: #{tpu_custom_call.1} parent=39 // pred_check_branch
          %481 = sbr.rel (%p479) target = $region44
        $region43: #{tpu_custom_call.1} parent=39 // pred_region
          %s482 = sand.u32 %s94, 1
          %s483 = scalar_lea.sflag [#allocation3], %s482
          %s484 = sand.u32 %s94, 1
          %s485 = smul.addr %s484, 136
          %s486 = scalar_lea.vmem [#allocation2], %s485
          %487 = dma.done %s483, 2176
        $region44: #{tpu_custom_call.1} parent=39 // pred_fallthru
          _
      $region40: #{tpu_custom_call.1} parent=5 // pred_fallthru
        _
    $region6: #{tpu_custom_call.1} parent=1 // loop_footer
      %s16 = sadd.s32 1, %s12
    $region7: #{tpu_custom_call.1} parent=1 // loop_footer_branch
      %11 = sbr.rel target = $region3
    $region8: #{tpu_custom_call.1} parent=1 // loop_exit
      _
    %488 = vsyncpa [#allocation3], 1
    %s489 = scalar_lea.sflag [#allocation3], 1
    %490 = vsyncpa %s489, 1

</llo_original>
